<compile_context>
chip_gen: v5e
topology: v5e:2x2
jax: 0.10.0
libtpu: 0.0.40
codegen_flags: <defaults>
</compile_context>

<pallas_src>
import functools

import jax
import jax.numpy as jnp
from jax.experimental import pallas as pl
from jax.experimental.pallas import tpu as pltpu

_LANE = 128


def _sublane_multiple(dtype) -> int:
    """Sublane granularity for a dtype's packed VMEM tiling (8/16/32)."""
    itemsize = jnp.dtype(dtype).itemsize
    return max(8, 32 // max(1, itemsize))


def _num_tensorcores() -> int:
    """Best-effort TensorCores-per-chip (2 on v7x, 1 on v5e/v6e); safe fallback 1."""
    try:
        info = pltpu.get_tpu_info()
    except Exception:
        return 1
    for attr in ("num_cores", "num_tensorcores", "tensorcore_count",
                 "cores_per_chip", "num_cores_per_chip"):
        try:
            n = int(getattr(info, attr))
        except (AttributeError, TypeError, ValueError):
            continue
        if n >= 1:
            return min(n, 2)
    return 1


def _bbce_kernel(l_ref, t_ref, out_ref, *, tr, chunk, n_inner, r_valid):
    """Accumulate [P, Ng, Sp, Sn] partial sums for one (tr, 128) tile.

    out_ref is a resident (1, 4, 8, 128) f32 accumulator block (same output
    block across every step of the inner "arbitrary" grid axis).
    """
    s = pl.program_id(0)              # parallel split (multi-TC chips)
    i = pl.program_id(1)              # streaming step within the split
    g = s * n_inner + i               # unclamped global tile index

    @pl.when(i == 0)
    def _init():
        out_ref[...] = jnp.zeros_like(out_ref)

    def chunk_parts(x, t, valid):
        """Per-element quantities for one chunk; mask only applied to compares."""
        x = x.astype(jnp.float32)
        t = t.astype(jnp.float32)
        is_pos = t == 1.0
        is_neg = t == 0.0
        if valid is not None:
            is_pos = jnp.logical_and(is_pos, valid)
            is_neg = jnp.logical_and(is_neg, valid)
        # Numerically stable BCE-with-logits: max(x,0) - x*t + log1p(exp(-|x|)).
        bce = jnp.maximum(x, 0.0) - x * t + jnp.log1p(jnp.exp(-jnp.abs(x)))
        return (jnp.where(is_pos, 1.0, 0.0),
                jnp.where(is_neg, 1.0, 0.0),
                jnp.where(is_pos, bce, 0.0),
                jnp.where(is_neg, bce, 0.0))

    if tr % 8 == 0:
        n_chunks = tr // chunk

        def tile_sums(masked):
            def step(c, carry):
                start = pl.multiple_of(c * chunk, chunk)
                valid = None
                if masked:
                    row = (g * tr + start +
                           jax.lax.broadcasted_iota(jnp.int32, (chunk, _LANE), 0))
                    valid = row < r_valid
                parts = chunk_parts(l_ref[pl.ds(start, chunk), :],
                                    t_ref[pl.ds(start, chunk), :], valid)
                return tuple(a + p.reshape(-1, 8, _LANE).sum(axis=0)
                             for a, p in zip(carry, parts))

            zero = jnp.zeros((8, _LANE), jnp.float32)
            return jax.lax.fori_loop(0, n_chunks, step, (zero,) * 4,
                                     unroll=n_chunks <= 8)

        def accumulate(masked):
            for q, v in enumerate(tile_sums(masked)):
                out_ref[0, q, :, :] = out_ref[0, q, :, :] + v

    else:
        # Tiny full-extent tile (tr < 32 rows, single grid step): accumulate
        # directly, folding full groups of 8 sublanes plus the remainder rows.
        def accumulate(masked):
            valid = None
            if masked:
                row = g * tr + jax.lax.broadcasted_iota(jnp.int32, (tr, _LANE), 0)
                valid = row < r_valid
            parts = chunk_parts(l_ref[...], t_ref[...], valid)
            full = (tr // 8) * 8
            rem = tr - full
            for q, v in enumerate(parts):
                if full:
                    out_ref[0, q, :, :] = (
                        out_ref[0, q, :, :] +
                        v[:full].reshape(-1, 8, _LANE).sum(axis=0))
                if rem:
                    out_ref[0, q, :rem, :] = out_ref[0, q, :rem, :] + v[full:, :]

    # Only boundary tiles (ragged last tile / clamped-duplicate overrun tiles
    # of the parallel split) pay for the iota/compare masking.
    boundary = (g + 1) * tr > r_valid

    @pl.when(jnp.logical_not(boundary))
    def _fast():
        accumulate(False)

    @pl.when(boundary)
    def _masked():
        accumulate(True)


def _partial_sums_ref(x, t):
    """Plain-JAX [P, Ng, Sp, Sn] partial sums (used only for the <128-elem tail)."""
    x = x.astype(jnp.float32)
    t = t.astype(jnp.float32)
    is_pos = t == 1.0
    is_neg = t == 0.0
    bce = jnp.maximum(x, 0.0) - x * t + jnp.log1p(jnp.exp(-jnp.abs(x)))
    zero = jnp.zeros_like(bce)
    return jnp.stack([jnp.sum(jnp.where(is_pos, 1.0, 0.0)),
                      jnp.sum(jnp.where(is_neg, 1.0, 0.0)),
                      jnp.sum(jnp.where(is_pos, bce, zero)),
                      jnp.sum(jnp.where(is_neg, bce, zero))])


def balanced_bce_loss(logits, target, reduction="mean", tile_rows=8192,
                      n_split=None):
    """Pallas TPU implementation of BalancedBCELoss.forward.

    Accepts f32/bf16 logits and f32/bf16/int8/bool targets directly (the
    kernel upcasts to f32 in-register); callers should NOT pre-upcast in HBM.
    """
    assert logits.shape == target.shape
    m = logits.size

    lf = logits.reshape(-1)
    tf = target.reshape(-1)

    # 128-aligned prefix streams through the Pallas kernel; the <128-element
    # tail (if any) is reduced in plain JAX instead of padding/copying the
    # whole array.
    m_main = (m // _LANE) * _LANE
    tail_sums = _partial_sums_ref(lf[m_main:], tf[m_main:]) if m_main != m else None

    sums = jnp.zeros((4,), jnp.float32)
    if m_main > 0:
        if m_main == m:
            lm, tm_ = lf, tf                       # pure reshape, no copy
        else:
            lm, tm_ = lf[:m_main], tf[:m_main]
        r = m_main // _LANE
        lm = lm.reshape(r, _LANE)
        tm_ = tm_.reshape(r, _LANE)

        # Row-tile size: multiple of the dtype sublane granularity (8/16/32),
        # or the full extent for tiny inputs (always a legal block).
        gmul = max(_sublane_multiple(lm.dtype), _sublane_multiple(tm_.dtype))
        if r >= gmul:
            req = max(gmul, (int(tile_rows) // gmul) * gmul)
            tr = min(req, (r // gmul) * gmul)
        else:
            tr = r

        steps = pl.cdiv(r, tr)
        ns = n_split if n_split is not None else _num_tensorcores()
        ns = max(1, min(int(ns), steps))
        n_inner = pl.cdiv(steps, ns)

        # Sub-chunk rows for the in-kernel fori_loop (bounds VMEM temporaries).
        chunk = tr
        if tr % 8 == 0:
            for c in (256, 128, 64, 32, 16, 8):
                if tr % c == 0:
                    chunk = c
                    break

        def in_idx(s, i):
            # Clamp so overrun tiles of the last split re-read a valid block;
            # the kernel fully masks them (their unclamped row range is >= r).
            return (jnp.minimum(s * n_inner + i, steps - 1), 0)

        kernel = functools.partial(_bbce_kernel, tr=tr, chunk=chunk,
                                   n_inner=n_inner, r_valid=r)

        in_block_bytes = tr * _LANE * (lm.dtype.itemsize + tm_.dtype.itemsize)
        vmem_limit = int(min(max(2 * in_block_bytes + (8 << 20), 32 << 20),
                             56 << 20))
        cost = pl.CostEstimate(
            flops=16 * m_main,
            transcendentals=2 * m_main,
            bytes_accessed=m_main * (lm.dtype.itemsize + tm_.dtype.itemsize)
            + ns * 4 * 8 * _LANE * 4)

        partials = pl.pallas_call(
            kernel,
            out_shape=jax.ShapeDtypeStruct((ns, 4, 8, _LANE), jnp.float32),
            grid_spec=pltpu.PrefetchScalarGridSpec(
                num_scalar_prefetch=0,
                grid=(ns, n_inner),
                in_specs=[
                    pl.BlockSpec((tr, _LANE), in_idx),
                    pl.BlockSpec((tr, _LANE), in_idx),
                ],
                out_specs=pl.BlockSpec((1, 4, 8, _LANE),
                                       lambda s, i: (s, 0, 0, 0)),
            ),
            compiler_params=pltpu.CompilerParams(
                dimension_semantics=("parallel", "arbitrary"),
                vmem_limit_bytes=vmem_limit),
            cost_estimate=cost,
        )(lm, tm_)

        sums = jnp.sum(partials, axis=(0, 2, 3))   # [P, Ng, Sp, Sn]

    if tail_sums is not None:
        sums = sums + tail_sums

    num_pos, num_neg = sums[0], sums[1]
    s_pos, s_neg = sums[2], sums[3]
    num_total = num_pos + num_neg
    alpha_pos = num_neg / num_total
    alpha_neg = num_pos / num_total
    weighted_sum = alpha_pos * s_pos + alpha_neg * s_neg
    if reduction == "mean":
        return weighted_sum / m
    if reduction == "sum":
        return weighted_sum
    # TODO(synk): reduction='none' (per-element weighted loss map) not implemented.
    raise NotImplementedError("reduction must be 'mean' or 'sum'")


def _reference(logits, target, reduction="mean"):
    """Pure-JAX reference mirroring the PyTorch BalancedBCELoss module."""
    x = logits.astype(jnp.float32)
    t = target.astype(jnp.float32)
    pos = (t == 1.0).astype(jnp.float32)
    neg = (t == 0.0).astype(jnp.float32)
    num_pos = pos.sum()
    num_neg = neg.sum()
    num_total = num_pos + num_neg
    alpha_pos = num_neg / num_total
    alpha_neg = num_pos / num_total
    w = alpha_pos * pos + alpha_neg * neg
    bce = jnp.maximum(x, 0.0) - x * t + jnp.log1p(jnp.exp(-jnp.abs(x)))
    if reduction == "mean":
        return jnp.mean(w * bce)
    return jnp.sum(w * bce)


if __name__ == "__main__":
    key = jax.random.PRNGKey(0)
    k1, k2, k3, k4, k5, k6, k7, k8 = jax.random.split(key, 8)

    # 1) NCHW, 128-aligned; tiny tile + forced 2-way split exercises the
    #    multi-tile accumulation across both grid axes.
    logits = jax.random.normal(k1, (2, 4, 16, 16), dtype=jnp.float32)
    target = (jax.random.uniform(k2, (2, 4, 16, 16)) > 0.3).astype(jnp.float32)
    ref = _reference(logits, target)
    loss = balanced_bce_loss(logits, target, tile_rows=8, n_split=2)
    jax.block_until_ready(loss)
    assert jnp.allclose(loss, ref, atol=1e-5, rtol=1e-5), (loss, ref)

    # Same input, default (large) tiles + architecture-aware split.
    loss_b = balanced_bce_loss(logits, target)
    jax.block_until_ready(loss_b)
    assert jnp.allclose(loss_b, ref, atol=1e-5, rtol=1e-5), (loss_b, ref)

    # reduction='sum'
    loss_s = balanced_bce_loss(logits, target, reduction="sum")
    jax.block_until_ready(loss_s)
    ref_s = _reference(logits, target, reduction="sum")
    assert jnp.allclose(loss_s, ref_s, atol=1e-3, rtol=1e-5), (loss_s, ref_s)

    # 2) Non-128-aligned numel: aligned prefix through the kernel (ragged,
    #    masked last tile) + plain-JAX tail for the final 48 elements.
    logits2 = jax.random.normal(k3, (1, 3, 20, 20), dtype=jnp.float32)
    target2 = (jax.random.uniform(k4, (1, 3, 20, 20)) > 0.5).astype(jnp.float32)
    loss2 = balanced_bce_loss(logits2, target2)
    jax.block_until_ready(loss2)
    ref2 = _reference(logits2, target2)
    assert jnp.allclose(loss2, ref2, atol=1e-5, rtol=1e-5), (loss2, ref2)

    # 3) Odd number of tiles with a forced 2-way split: exercises both the
    #    ragged boundary tile and the clamped, fully-masked overrun tile.
    logits3 = jax.random.normal(k5, (3, 4, 16, 16), dtype=jnp.float32)
    target3 = (jax.random.uniform(k6, (3, 4, 16, 16)) > 0.5).astype(jnp.float32)
    loss3 = balanced_bce_loss(logits3, target3, tile_rows=40, n_split=2)
    jax.block_until_ready(loss3)
    ref3 = _reference(logits3, target3)
    assert jnp.allclose(loss3, ref3, atol=1e-5, rtol=1e-5), (loss3, ref3)

    # 4) bf16 logits + int8 targets (reduced-HBM-traffic caller contract).
    logits4 = jax.random.normal(k7, (2, 4, 16, 16),
                                dtype=jnp.float32).astype(jnp.bfloat16)
    target4 = (jax.random.uniform(k8, (2, 4, 16, 16)) > 0.4).astype(jnp.int8)
    loss4 = balanced_bce_loss(logits4, target4)
    jax.block_until_ready(loss4)
    ref4 = _reference(logits4, target4.astype(jnp.float32))
    assert jnp.allclose(loss4, ref4, atol=1e-4, rtol=1e-4), (loss4, ref4)

    # 5) Fewer than 128 elements: pure plain-JAX tail path (no Pallas call).
    logits5 = jax.random.normal(k1, (4, 20), dtype=jnp.float32)
    target5 = (jax.random.uniform(k2, (4, 20)) > 0.5).astype(jnp.float32)
    loss5 = balanced_bce_loss(logits5, target5)
    jax.block_until_ready(loss5)
    ref5 = _reference(logits5, target5)
    assert jnp.allclose(loss5, ref5, atol=1e-5, rtol=1e-5), (loss5, ref5)

    print("KERNEL_OK")
</pallas_src>

<mosaic_0001>
module attributes {stable_mosaic.version = 11 : i64} {
  func.func @_bbce_kernel(%arg0: i32, %arg1: i32, %arg2: memref<8x128xf32, #tpu.memory_space<vmem>>, %arg3: memref<8x128xf32, #tpu.memory_space<vmem>>, %arg4: memref<1x4x8x128xf32, #tpu.memory_space<vmem>>) attributes {dimension_semantics = [#tpu.dimension_semantics<parallel>, #tpu.dimension_semantics<arbitrary>], iteration_bounds = array<i64: 2, 1>, scalar_prefetch = 0 : i64, scratch_operands = 0 : i64, tpu.core_type = #tpu.core_type<tc>, window_params = [{transform_indices = @transform_0, window_bounds = array<i64: 8, 128>}, {transform_indices = @transform_1, window_bounds = array<i64: 8, 128>}, {transform_indices = @transform_2, window_bounds = array<i64: 1, 4, 8, 128>}]} {
    %c1_i32 = arith.constant 1 : i32
    %0 = arith.muli %arg0, %c1_i32 : i32
    %1 = arith.addi %0, %arg1 : i32
    %c0_i32 = arith.constant 0 : i32
    %2 = arith.cmpi eq, %arg1, %c0_i32 : i32
    %3 = arith.extui %2 : i1 to i32
    %c0_i32_0 = arith.constant 0 : i32
    %4 = arith.cmpi ne, %3, %c0_i32_0 : i32
    scf.if %4 {
      %cst = arith.constant 0.000000e+00 : f32
      %13 = vector.broadcast %cst : f32 to vector<1x4x8x128xf32>
      %c0 = arith.constant 0 : index
      %c0_4 = arith.constant 0 : index
      %c0_5 = arith.constant 0 : index
      %c0_6 = arith.constant 0 : index
      %14 = vector.load %arg4[%c0, %c0_4, %c0_5, %c0_6] : memref<1x4x8x128xf32, #tpu.memory_space<vmem>>, vector<1x4x8x128xf32>
      tpu.vector_store %arg4[%c0, %c0_4, %c0_5, %c0_6], %13 {strides = array<i32>} : memref<1x4x8x128xf32, #tpu.memory_space<vmem>>, vector<1x4x8x128xf32>,
    } else {
    }
    %c1_i32_1 = arith.constant 1 : i32
    %5 = arith.addi %1, %c1_i32_1 : i32
    %c8_i32 = arith.constant 8 : i32
    %6 = arith.muli %5, %c8_i32 : i32
    %c16_i32 = arith.constant 16 : i32
    %7 = arith.cmpi sgt, %6, %c16_i32 : i32
    %true = arith.constant true
    %8 = arith.xori %7, %true : i1
    %9 = arith.extui %8 : i1 to i32
    %c0_i32_2 = arith.constant 0 : i32
    %10 = arith.cmpi ne, %9, %c0_i32_2 : i32
    scf.if %10 {
      %cst = arith.constant 0.000000e+00 : f32
      %13 = vector.broadcast %cst : f32 to vector<8x128xf32>
      %c0_i32_4 = arith.constant 0 : i32
      %c8_i32_5 = arith.constant 8 : i32
      %14 = arith.muli %c0_i32_4, %c8_i32_5 : i32
      %15 = tpu.assume_multiple %14, 8 : i32
      %16 = arith.index_cast %15 : i32 to index
      %c0 = arith.constant 0 : index
      %17 = vector.load %arg2[%16, %c0] : memref<8x128xf32, #tpu.memory_space<vmem>>, vector<8x128xf32>
      %18 = arith.index_cast %15 : i32 to index
      %c0_6 = arith.constant 0 : index
      %19 = vector.load %arg3[%18, %c0_6] : memref<8x128xf32, #tpu.memory_space<vmem>>, vector<8x128xf32>
      %cst_7 = arith.constant 1.000000e+00 : f32
      %20 = vector.broadcast %cst_7 : f32 to vector<8x128xf32>
      %21 = arith.cmpf oeq, %19, %20 : vector<8x128xf32>
      %cst_8 = arith.constant 0.000000e+00 : f32
      %22 = vector.broadcast %cst_8 : f32 to vector<8x128xf32>
      %23 = arith.cmpf oeq, %19, %22 : vector<8x128xf32>
      %cst_9 = arith.constant 0.000000e+00 : f32
      %24 = vector.broadcast %cst_9 : f32 to vector<8x128xf32>
      %25 = arith.maximumf %17, %24 : vector<8x128xf32>
      %26 = arith.mulf %17, %19 : vector<8x128xf32>
      %27 = arith.subf %25, %26 : vector<8x128xf32>
      %28 = math.absf %17 : vector<8x128xf32>
      %cst_10 = arith.constant 0.000000e+00 : f32
      %29 = vector.broadcast %cst_10 : f32 to vector<8x128xf32>
      %30 = arith.subf %29, %28 : vector<8x128xf32>
      %31 = math.exp %30 : vector<8x128xf32>
      %32 = math.log1p %31 : vector<8x128xf32>
      %33 = arith.addf %27, %32 : vector<8x128xf32>
      %cst_11 = arith.constant 1.000000e+00 : f32
      %cst_12 = arith.constant 0.000000e+00 : f32
      %34 = vector.broadcast %cst_11 : f32 to vector<8x128xf32>
      %35 = vector.broadcast %cst_12 : f32 to vector<8x128xf32>
      %36 = arith.select %21, %34, %35 : vector<8x128xi1>, vector<8x128xf32>
      %cst_13 = arith.constant 1.000000e+00 : f32
      %cst_14 = arith.constant 0.000000e+00 : f32
      %37 = vector.broadcast %cst_13 : f32 to vector<8x128xf32>
      %38 = vector.broadcast %cst_14 : f32 to vector<8x128xf32>
      %39 = arith.select %23, %37, %38 : vector<8x128xi1>, vector<8x128xf32>
      %cst_15 = arith.constant 0.000000e+00 : f32
      %40 = vector.broadcast %cst_15 : f32 to vector<8x128xf32>
      %41 = arith.select %21, %33, %40 : vector<8x128xi1>, vector<8x128xf32>
      %cst_16 = arith.constant 0.000000e+00 : f32
      %42 = vector.broadcast %cst_16 : f32 to vector<8x128xf32>
      %43 = arith.select %23, %33, %42 : vector<8x128xi1>, vector<8x128xf32>
      %44 = vector.shape_cast %36 : vector<8x128xf32> to vector<1x8x128xf32>
      %cst_17 = arith.constant dense<0.000000e+00> : vector<8x128xf32>
      %45 = vector.multi_reduction <add>, %44, %cst_17 [0] : vector<1x8x128xf32> to vector<8x128xf32>
      %46 = arith.addf %13, %45 : vector<8x128xf32>
      %47 = vector.shape_cast %39 : vector<8x128xf32> to vector<1x8x128xf32>
      %cst_18 = arith.constant dense<0.000000e+00> : vector<8x128xf32>
      %48 = vector.multi_reduction <add>, %47, %cst_18 [0] : vector<1x8x128xf32> to vector<8x128xf32>
      %49 = arith.addf %13, %48 : vector<8x128xf32>
      %50 = vector.shape_cast %41 : vector<8x128xf32> to vector<1x8x128xf32>
      %cst_19 = arith.constant dense<0.000000e+00> : vector<8x128xf32>
      %51 = vector.multi_reduction <add>, %50, %cst_19 [0] : vector<1x8x128xf32> to vector<8x128xf32>
      %52 = arith.addf %13, %51 : vector<8x128xf32>
      %53 = vector.shape_cast %43 : vector<8x128xf32> to vector<1x8x128xf32>
      %cst_20 = arith.constant dense<0.000000e+00> : vector<8x128xf32>
      %54 = vector.multi_reduction <add>, %53, %cst_20 [0] : vector<1x8x128xf32> to vector<8x128xf32>
      %55 = arith.addf %13, %54 : vector<8x128xf32>
      %c1_i32_21 = arith.constant 1 : i32
      %c0_22 = arith.constant 0 : index
      %c0_23 = arith.constant 0 : index
      %c0_24 = arith.constant 0 : index
      %c0_25 = arith.constant 0 : index
      %56 = vector.load %arg4[%c0_22, %c0_23, %c0_24, %c0_25] : memref<1x4x8x128xf32, #tpu.memory_space<vmem>>, vector<1x1x8x128xf32>
      %57 = vector.shape_cast %56 : vector<1x1x8x128xf32> to vector<8x128xf32>
      %58 = arith.addf %57, %46 : vector<8x128xf32>
      %c0_26 = arith.constant 0 : index
      %c0_27 = arith.constant 0 : index
      %c0_28 = arith.constant 0 : index
      %c0_29 = arith.constant 0 : index
      %59 = vector.load %arg4[%c0_26, %c0_27, %c0_28, %c0_29] : memref<1x4x8x128xf32, #tpu.memory_space<vmem>>, vector<1x1x8x128xf32>
      %60 = vector.shape_cast %59 : vector<1x1x8x128xf32> to vector<8x128xf32>
      %61 = vector.shape_cast %58 : vector<8x128xf32> to vector<1x1x8x128xf32>
      tpu.vector_store %arg4[%c0_26, %c0_27, %c0_28, %c0_29], %61 {strides = array<i32>} : memref<1x4x8x128xf32, #tpu.memory_space<vmem>>, vector<1x1x8x128xf32>,
      %c0_30 = arith.constant 0 : index
      %c1 = arith.constant 1 : index
      %c0_31 = arith.constant 0 : index
      %c0_32 = arith.constant 0 : index
      %62 = vector.load %arg4[%c0_30, %c1, %c0_31, %c0_32] : memref<1x4x8x128xf32, #tpu.memory_space<vmem>>, vector<1x1x8x128xf32>
      %63 = vector.shape_cast %62 : vector<1x1x8x128xf32> to vector<8x128xf32>
      %64 = arith.addf %63, %49 : vector<8x128xf32>
      %c0_33 = arith.constant 0 : index
      %c1_34 = arith.constant 1 : index
      %c0_35 = arith.constant 0 : index
      %c0_36 = arith.constant 0 : index
      %65 = vector.load %arg4[%c0_33, %c1_34, %c0_35, %c0_36] : memref<1x4x8x128xf32, #tpu.memory_space<vmem>>, vector<1x1x8x128xf32>
      %66 = vector.shape_cast %65 : vector<1x1x8x128xf32> to vector<8x128xf32>
      %67 = vector.shape_cast %64 : vector<8x128xf32> to vector<1x1x8x128xf32>
      tpu.vector_store %arg4[%c0_33, %c1_34, %c0_35, %c0_36], %67 {strides = array<i32>} : memref<1x4x8x128xf32, #tpu.memory_space<vmem>>, vector<1x1x8x128xf32>,
      %c0_37 = arith.constant 0 : index
      %c2 = arith.constant 2 : index
      %c0_38 = arith.constant 0 : index
      %c0_39 = arith.constant 0 : index
      %68 = vector.load %arg4[%c0_37, %c2, %c0_38, %c0_39] : memref<1x4x8x128xf32, #tpu.memory_space<vmem>>, vector<1x1x8x128xf32>
      %69 = vector.shape_cast %68 : vector<1x1x8x128xf32> to vector<8x128xf32>
      %70 = arith.addf %69, %52 : vector<8x128xf32>
      %c0_40 = arith.constant 0 : index
      %c2_41 = arith.constant 2 : index
      %c0_42 = arith.constant 0 : index
      %c0_43 = arith.constant 0 : index
      %71 = vector.load %arg4[%c0_40, %c2_41, %c0_42, %c0_43] : memref<1x4x8x128xf32, #tpu.memory_space<vmem>>, vector<1x1x8x128xf32>
      %72 = vector.shape_cast %71 : vector<1x1x8x128xf32> to vector<8x128xf32>
      %73 = vector.shape_cast %70 : vector<8x128xf32> to vector<1x1x8x128xf32>
      tpu.vector_store %arg4[%c0_40, %c2_41, %c0_42, %c0_43], %73 {strides = array<i32>} : memref<1x4x8x128xf32, #tpu.memory_space<vmem>>, vector<1x1x8x128xf32>,
      %c0_44 = arith.constant 0 : index
      %c3 = arith.constant 3 : index
      %c0_45 = arith.constant 0 : index
      %c0_46 = arith.constant 0 : index
      %74 = vector.load %arg4[%c0_44, %c3, %c0_45, %c0_46] : memref<1x4x8x128xf32, #tpu.memory_space<vmem>>, vector<1x1x8x128xf32>
      %75 = vector.shape_cast %74 : vector<1x1x8x128xf32> to vector<8x128xf32>
      %76 = arith.addf %75, %55 : vector<8x128xf32>
      %c0_47 = arith.constant 0 : index
      %c3_48 = arith.constant 3 : index
      %c0_49 = arith.constant 0 : index
      %c0_50 = arith.constant 0 : index
      %77 = vector.load %arg4[%c0_47, %c3_48, %c0_49, %c0_50] : memref<1x4x8x128xf32, #tpu.memory_space<vmem>>, vector<1x1x8x128xf32>
      %78 = vector.shape_cast %77 : vector<1x1x8x128xf32> to vector<8x128xf32>
      %79 = vector.shape_cast %76 : vector<8x128xf32> to vector<1x1x8x128xf32>
      tpu.vector_store %arg4[%c0_47, %c3_48, %c0_49, %c0_50], %79 {strides = array<i32>} : memref<1x4x8x128xf32, #tpu.memory_space<vmem>>, vector<1x1x8x128xf32>,
    } else {
    }
    %11 = arith.extui %7 : i1 to i32
    %c0_i32_3 = arith.constant 0 : i32
    %12 = arith.cmpi ne, %11, %c0_i32_3 : i32
    scf.if %12 {
      %cst = arith.constant 0.000000e+00 : f32
      %13 = vector.broadcast %cst : f32 to vector<8x128xf32>
      %c0_i32_4 = arith.constant 0 : i32
      %c8_i32_5 = arith.constant 8 : i32
      %14 = arith.muli %c0_i32_4, %c8_i32_5 : i32
      %15 = tpu.assume_multiple %14, 8 : i32
      %c8_i32_6 = arith.constant 8 : i32
      %16 = arith.muli %1, %c8_i32_6 : i32
      %17 = arith.addi %16, %15 : i32
      %18 = tpu.iota {dimensions = array<i32: 0>} : vector<8x128xi32>
      %19 = vector.broadcast %17 : i32 to vector<8x128xi32>
      %20 = arith.addi %19, %18 : vector<8x128xi32>
      %c16_i32_7 = arith.constant 16 : i32
      %21 = vector.broadcast %c16_i32_7 : i32 to vector<8x128xi32>
      %22 = arith.cmpi slt, %20, %21 : vector<8x128xi32>
      %23 = arith.index_cast %15 : i32 to index
      %c0 = arith.constant 0 : index
      %24 = vector.load %arg2[%23, %c0] : memref<8x128xf32, #tpu.memory_space<vmem>>, vector<8x128xf32>
      %25 = arith.index_cast %15 : i32 to index
      %c0_8 = arith.constant 0 : index
      %26 = vector.load %arg3[%25, %c0_8] : memref<8x128xf32, #tpu.memory_space<vmem>>, vector<8x128xf32>
      %cst_9 = arith.constant 1.000000e+00 : f32
      %27 = vector.broadcast %cst_9 : f32 to vector<8x128xf32>
      %28 = arith.cmpf oeq, %26, %27 : vector<8x128xf32>
      %cst_10 = arith.constant 0.000000e+00 : f32
      %29 = vector.broadcast %cst_10 : f32 to vector<8x128xf32>
      %30 = arith.cmpf oeq, %26, %29 : vector<8x128xf32>
      %31 = arith.andi %28, %22 : vector<8x128xi1>
      %32 = arith.andi %30, %22 : vector<8x128xi1>
      %cst_11 = arith.constant 0.000000e+00 : f32
      %33 = vector.broadcast %cst_11 : f32 to vector<8x128xf32>
      %34 = arith.maximumf %24, %33 : vector<8x128xf32>
      %35 = arith.mulf %24, %26 : vector<8x128xf32>
      %36 = arith.subf %34, %35 : vector<8x128xf32>
      %37 = math.absf %24 : vector<8x128xf32>
      %cst_12 = arith.constant 0.000000e+00 : f32
      %38 = vector.broadcast %cst_12 : f32 to vector<8x128xf32>
      %39 = arith.subf %38, %37 : vector<8x128xf32>
      %40 = math.exp %39 : vector<8x128xf32>
      %41 = math.log1p %40 : vector<8x128xf32>
      %42 = arith.addf %36, %41 : vector<8x128xf32>
      %cst_13 = arith.constant 1.000000e+00 : f32
      %cst_14 = arith.constant 0.000000e+00 : f32
      %43 = vector.broadcast %cst_13 : f32 to vector<8x128xf32>
      %44 = vector.broadcast %cst_14 : f32 to vector<8x128xf32>
      %45 = arith.select %31, %43, %44 : vector<8x128xi1>, vector<8x128xf32>
      %cst_15 = arith.constant 1.000000e+00 : f32
      %cst_16 = arith.constant 0.000000e+00 : f32
      %46 = vector.broadcast %cst_15 : f32 to vector<8x128xf32>
      %47 = vector.broadcast %cst_16 : f32 to vector<8x128xf32>
      %48 = arith.select %32, %46, %47 : vector<8x128xi1>, vector<8x128xf32>
      %cst_17 = arith.constant 0.000000e+00 : f32
      %49 = vector.broadcast %cst_17 : f32 to vector<8x128xf32>
      %50 = arith.select %31, %42, %49 : vector<8x128xi1>, vector<8x128xf32>
      %cst_18 = arith.constant 0.000000e+00 : f32
      %51 = vector.broadcast %cst_18 : f32 to vector<8x128xf32>
      %52 = arith.select %32, %42, %51 : vector<8x128xi1>, vector<8x128xf32>
      %53 = vector.shape_cast %45 : vector<8x128xf32> to vector<1x8x128xf32>
      %cst_19 = arith.constant dense<0.000000e+00> : vector<8x128xf32>
      %54 = vector.multi_reduction <add>, %53, %cst_19 [0] : vector<1x8x128xf32> to vector<8x128xf32>
      %55 = arith.addf %13, %54 : vector<8x128xf32>
      %56 = vector.shape_cast %48 : vector<8x128xf32> to vector<1x8x128xf32>
      %cst_20 = arith.constant dense<0.000000e+00> : vector<8x128xf32>
      %57 = vector.multi_reduction <add>, %56, %cst_20 [0] : vector<1x8x128xf32> to vector<8x128xf32>
      %58 = arith.addf %13, %57 : vector<8x128xf32>
      %59 = vector.shape_cast %50 : vector<8x128xf32> to vector<1x8x128xf32>
      %cst_21 = arith.constant dense<0.000000e+00> : vector<8x128xf32>
      %60 = vector.multi_reduction <add>, %59, %cst_21 [0] : vector<1x8x128xf32> to vector<8x128xf32>
      %61 = arith.addf %13, %60 : vector<8x128xf32>
      %62 = vector.shape_cast %52 : vector<8x128xf32> to vector<1x8x128xf32>
      %cst_22 = arith.constant dense<0.000000e+00> : vector<8x128xf32>
      %63 = vector.multi_reduction <add>, %62, %cst_22 [0] : vector<1x8x128xf32> to vector<8x128xf32>
      %64 = arith.addf %13, %63 : vector<8x128xf32>
      %c1_i32_23 = arith.constant 1 : i32
      %c0_24 = arith.constant 0 : index
      %c0_25 = arith.constant 0 : index
      %c0_26 = arith.constant 0 : index
      %c0_27 = arith.constant 0 : index
      %65 = vector.load %arg4[%c0_24, %c0_25, %c0_26, %c0_27] : memref<1x4x8x128xf32, #tpu.memory_space<vmem>>, vector<1x1x8x128xf32>
      %66 = vector.shape_cast %65 : vector<1x1x8x128xf32> to vector<8x128xf32>
      %67 = arith.addf %66, %55 : vector<8x128xf32>
      %c0_28 = arith.constant 0 : index
      %c0_29 = arith.constant 0 : index
      %c0_30 = arith.constant 0 : index
      %c0_31 = arith.constant 0 : index
      %68 = vector.load %arg4[%c0_28, %c0_29, %c0_30, %c0_31] : memref<1x4x8x128xf32, #tpu.memory_space<vmem>>, vector<1x1x8x128xf32>
      %69 = vector.shape_cast %68 : vector<1x1x8x128xf32> to vector<8x128xf32>
      %70 = vector.shape_cast %67 : vector<8x128xf32> to vector<1x1x8x128xf32>
      tpu.vector_store %arg4[%c0_28, %c0_29, %c0_30, %c0_31], %70 {strides = array<i32>} : memref<1x4x8x128xf32, #tpu.memory_space<vmem>>, vector<1x1x8x128xf32>,
      %c0_32 = arith.constant 0 : index
      %c1 = arith.constant 1 : index
      %c0_33 = arith.constant 0 : index
      %c0_34 = arith.constant 0 : index
      %71 = vector.load %arg4[%c0_32, %c1, %c0_33, %c0_34] : memref<1x4x8x128xf32, #tpu.memory_space<vmem>>, vector<1x1x8x128xf32>
      %72 = vector.shape_cast %71 : vector<1x1x8x128xf32> to vector<8x128xf32>
      %73 = arith.addf %72, %58 : vector<8x128xf32>
      %c0_35 = arith.constant 0 : index
      %c1_36 = arith.constant 1 : index
      %c0_37 = arith.constant 0 : index
      %c0_38 = arith.constant 0 : index
      %74 = vector.load %arg4[%c0_35, %c1_36, %c0_37, %c0_38] : memref<1x4x8x128xf32, #tpu.memory_space<vmem>>, vector<1x1x8x128xf32>
      %75 = vector.shape_cast %74 : vector<1x1x8x128xf32> to vector<8x128xf32>
      %76 = vector.shape_cast %73 : vector<8x128xf32> to vector<1x1x8x128xf32>
      tpu.vector_store %arg4[%c0_35, %c1_36, %c0_37, %c0_38], %76 {strides = array<i32>} : memref<1x4x8x128xf32, #tpu.memory_space<vmem>>, vector<1x1x8x128xf32>,
      %c0_39 = arith.constant 0 : index
      %c2 = arith.constant 2 : index
      %c0_40 = arith.constant 0 : index
      %c0_41 = arith.constant 0 : index
      %77 = vector.load %arg4[%c0_39, %c2, %c0_40, %c0_41] : memref<1x4x8x128xf32, #tpu.memory_space<vmem>>, vector<1x1x8x128xf32>
      %78 = vector.shape_cast %77 : vector<1x1x8x128xf32> to vector<8x128xf32>
      %79 = arith.addf %78, %61 : vector<8x128xf32>
      %c0_42 = arith.constant 0 : index
      %c2_43 = arith.constant 2 : index
      %c0_44 = arith.constant 0 : index
      %c0_45 = arith.constant 0 : index
      %80 = vector.load %arg4[%c0_42, %c2_43, %c0_44, %c0_45] : memref<1x4x8x128xf32, #tpu.memory_space<vmem>>, vector<1x1x8x128xf32>
      %81 = vector.shape_cast %80 : vector<1x1x8x128xf32> to vector<8x128xf32>
      %82 = vector.shape_cast %79 : vector<8x128xf32> to vector<1x1x8x128xf32>
      tpu.vector_store %arg4[%c0_42, %c2_43, %c0_44, %c0_45], %82 {strides = array<i32>} : memref<1x4x8x128xf32, #tpu.memory_space<vmem>>, vector<1x1x8x128xf32>,
      %c0_46 = arith.constant 0 : index
      %c3 = arith.constant 3 : index
      %c0_47 = arith.constant 0 : index
      %c0_48 = arith.constant 0 : index
      %83 = vector.load %arg4[%c0_46, %c3, %c0_47, %c0_48] : memref<1x4x8x128xf32, #tpu.memory_space<vmem>>, vector<1x1x8x128xf32>
      %84 = vector.shape_cast %83 : vector<1x1x8x128xf32> to vector<8x128xf32>
      %85 = arith.addf %84, %64 : vector<8x128xf32>
      %c0_49 = arith.constant 0 : index
      %c3_50 = arith.constant 3 : index
      %c0_51 = arith.constant 0 : index
      %c0_52 = arith.constant 0 : index
      %86 = vector.load %arg4[%c0_49, %c3_50, %c0_51, %c0_52] : memref<1x4x8x128xf32, #tpu.memory_space<vmem>>, vector<1x1x8x128xf32>
      %87 = vector.shape_cast %86 : vector<1x1x8x128xf32> to vector<8x128xf32>
      %88 = vector.shape_cast %85 : vector<8x128xf32> to vector<1x1x8x128xf32>
      tpu.vector_store %arg4[%c0_49, %c3_50, %c0_51, %c0_52], %88 {strides = array<i32>} : memref<1x4x8x128xf32, #tpu.memory_space<vmem>>, vector<1x1x8x128xf32>,
    } else {
    }
    return
  }
  func.func @transform_0(%arg0: i32, %arg1: i32) -> (i32, i32) {
    %c1_i32 = arith.constant 1 : i32
    %0 = arith.muli %arg0, %c1_i32 : i32
    %1 = arith.addi %0, %arg1 : i32
    %c1_i32_0 = arith.constant 1 : i32
    %2 = arith.minsi %1, %c1_i32_0 : i32
    %c0_i32 = arith.constant 0 : i32
    %c0_i32_1 = arith.constant 0 : i32
    return %2, %c0_i32 : i32, i32
  }
  func.func @transform_1(%arg0: i32, %arg1: i32) -> (i32, i32) {
    %c1_i32 = arith.constant 1 : i32
    %0 = arith.muli %arg0, %c1_i32 : i32
    %1 = arith.addi %0, %arg1 : i32
    %c1_i32_0 = arith.constant 1 : i32
    %2 = arith.minsi %1, %c1_i32_0 : i32
    %c0_i32 = arith.constant 0 : i32
    %c0_i32_1 = arith.constant 0 : i32
    return %2, %c0_i32 : i32, i32
  }
  func.func @transform_2(%arg0: i32, %arg1: i32) -> (i32, i32, i32, i32) {
    %c0_i32 = arith.constant 0 : i32
    %c0_i32_0 = arith.constant 0 : i32
    %c0_i32_1 = arith.constant 0 : i32
    %c0_i32_2 = arith.constant 0 : i32
    return %arg0, %c0_i32, %c0_i32_0, %c0_i32_1 : i32, i32, i32, i32
  }
}

</mosaic_0001>

<llo_original>
// kernel: tpu_custom_call.1
$region0: #{tpu_custom_call.1}
  #allocation0 [shape = 'u32[]', space=smem, size = 0x4, offset = 0x4, fixed_abs, tag = 'smem constant byte address 0x4 - core index']
  #allocation1 [shape = 'u32[72,128]{1,0:T(1,128)}', space=vmem, size = 0x9000, scoped, tag = 'internal scratch']
  %s0 = inlined_call_operand.hbm [shape: f32[16,128], index: 0, kind: input, shape index: {}]
  %s1 = inlined_call_operand.hbm [shape: f32[16,128], index: 1, kind: input, shape index: {}]
  %s2 = inlined_call_operand.hbm [shape: f32[2,4,8,128], index: 2, kind: output, shape index: {}]
  %s3 = sld [smem:[#allocation0]]
  $region61: #{tpu_custom_call.1} parent=0
    _
  %s5 = ssub.s32 1, %s3
  %s6 = scalar_select 0, %s5, %s3
  $region1: #{tpu_custom_call.1} parent=0
    #allocation2 [shape = 'u8[8192]{0}', space=vmem, size = 0x2000, scoped, tag = 'input window, operand 0']
    #allocation3 [shape = 's32[2]{0}', space=sflag, size = 0x8, scoped, tag = 'scoped memory for tpu_custom_call.1']
    #allocation4 [shape = 's32[2]{0}', space=sflag, size = 0x8, scoped, tag = 'scoped memory for tpu_custom_call.1']
    #allocation5 [shape = 'u8[8192]{0}', space=vmem, size = 0x2000, scoped, tag = 'input window, operand 1']
    #allocation6 [shape = 's32[2]{0}', space=sflag, size = 0x8, scoped, tag = 'scoped memory for tpu_custom_call.1']
    #allocation7 [shape = 'u8[32768]{0}', space=vmem, size = 0x8000, scoped, tag = 'output window, operand 0']
    %7 = vsyncpa [#allocation3], 0
    %s8 = scalar_lea.sflag [#allocation3], 1
    %9 = vsyncpa %s8, 0
    %10 = vsyncpa [#allocation6], 0
    %s11 = scalar_lea.sflag [#allocation6], 1
    %12 = vsyncpa %s11, 0
    %13 = vsyncpa [#allocation4], 0
    %s14 = scalar_lea.sflag [#allocation4], 1
    %15 = vsyncpa %s14, 0
    loop: start=0, step=1, limit=4
    $region2: #{tpu_custom_call.1} parent=1 // loop_pre_header
      _
    $region3: #{tpu_custom_call.1} parent=1 // loop_header
      %s17 = sphi 0, %s21
      %p18 = scmp.ge.s32.totalorder %s17, 4
      %s24 = sphi 0, %s36
      %s25 = sphi 0, %s32
      %s26 = sphi 0, %s24
      %s27 = sphi 0, %s25
      %s28 = sphi 0, %s26
      %s29 = sphi 0, %s27
      %s45 = sphi 0, %s47
      %s48 = sphi 0, %s45
      %s49 = sphi 0, %s48
      %s65 = sphi 0, %s49
      %s77 = sphi 0, %s79
      %s80 = sphi 0, %s77
      %s81 = sphi 0, %s80
      %s97 = sphi 0, %s81
      %s103 = sphi 0, %s105
      %s106 = sphi 0, %s103
      %s107 = sphi 0, %s106
      %s123 = sphi 0, %s107
    $region4: #{tpu_custom_call.1} parent=1 // loop_header_branch
      %20 = sbr.rel (%p18) target = $region8
    $region5: #{tpu_custom_call.1} parent=1 // loop_body
      %s22 = ssub.s32 %s17, 1
      %s23 = ssub.s32 %s17, 2
      %s30 = sadd.s32 1, %s25
      %p31 = scmp.ge.s32.totalorder %s30, 1
      %s32 = scalar_select %p31, 0, %s30
      %s33 = sadd.s32 1, %s24
      %s34 = scalar_select %p31, %s33, %s24
      %p35 = scmp.ge.s32.totalorder %s34, 2
      %s36 = scalar_select %p35, 0, %s34
      %s37 = sadd.s32 %s24, %s25
      %p38 = scmp.lt.s32.totalorder %s37, 1
      %s39 = scalar_select %p38, %s37, 1
      %s40 = sadd.s32 %s36, %s32
      %p41 = scmp.lt.s32.totalorder %s40, 1
      %s42 = scalar_select %p41, %s40, 1
      %s43 = ssub.s32 %s39, %s42
      %p44 = scmp.eq.s32.totalorder %s43, 0
      %s46 = sadd.s32 %s45, 1
      %s47 = scalar_select %p44, %s45, %s46
      %p50 = pneg %p44
      %p51 = scmp.eq.s32.totalorder %s17, 1
      %p52 = por %p50, %p51
      %p53 = scmp.ne.s32.totalorder %s45, %s48
      %p54 = scmp.eq.s32.totalorder %s17, 0
      %p55 = por %p53, %p54
      %p56 = scmp.ne.s32.totalorder %s45, %s48
      %p57 = scmp.eq.s32.totalorder %s22, 1
      %p58 = por %p56, %p57
      %p59 = scmp.ne.s32.totalorder %s48, %s49
      %p60 = scmp.eq.s32.totalorder %s22, 0
      %p61 = por %p59, %p60
      %p62 = scmp.ne.s32.totalorder %s48, %s49
      %p63 = scmp.eq.s32.totalorder %s23, 1
      %p64 = por %p62, %p63
      %p66 = scmp.ne.s32.totalorder %s49, %s65
      %p67 = scmp.eq.s32.totalorder %s23, 0
      %p68 = por %p66, %p67
      %s69 = sadd.s32 %s24, %s25
      %p70 = scmp.lt.s32.totalorder %s69, 1
      %s71 = scalar_select %p70, %s69, 1
      %s72 = sadd.s32 %s36, %s32
      %p73 = scmp.lt.s32.totalorder %s72, 1
      %s74 = scalar_select %p73, %s72, 1
      %s75 = ssub.s32 %s71, %s74
      %p76 = scmp.eq.s32.totalorder %s75, 0
      %s78 = sadd.s32 %s77, 1
      %s79 = scalar_select %p76, %s77, %s78
      %p82 = pneg %p76
      %p83 = scmp.eq.s32.totalorder %s17, 1
      %p84 = por %p82, %p83
      %p85 = scmp.ne.s32.totalorder %s77, %s80
      %p86 = scmp.eq.s32.totalorder %s17, 0
      %p87 = por %p85, %p86
      %p88 = scmp.ne.s32.totalorder %s77, %s80
      %p89 = scmp.eq.s32.totalorder %s22, 1
      %p90 = por %p88, %p89
      %p91 = scmp.ne.s32.totalorder %s80, %s81
      %p92 = scmp.eq.s32.totalorder %s22, 0
      %p93 = por %p91, %p92
      %p94 = scmp.ne.s32.totalorder %s80, %s81
      %p95 = scmp.eq.s32.totalorder %s23, 1
      %p96 = por %p94, %p95
      %p98 = scmp.ne.s32.totalorder %s81, %s97
      %p99 = scmp.eq.s32.totalorder %s23, 0
      %p100 = por %p98, %p99
      %s101 = ssub.s32 %s24, %s36
      %p102 = scmp.eq.s32.totalorder %s101, 0
      %s104 = sadd.s32 %s103, 1
      %s105 = scalar_select %p102, %s103, %s104
      %p108 = pneg %p102
      %p109 = scmp.eq.s32.totalorder %s17, 1
      %p110 = por %p108, %p109
      %p111 = scmp.ne.s32.totalorder %s103, %s106
      %p112 = scmp.eq.s32.totalorder %s17, 0
      %p113 = por %p111, %p112
      %p114 = scmp.ne.s32.totalorder %s103, %s106
      %p115 = scmp.eq.s32.totalorder %s22, 1
      %p116 = por %p114, %p115
      %p117 = scmp.ne.s32.totalorder %s106, %s107
      %p118 = scmp.eq.s32.totalorder %s22, 0
      %p119 = por %p117, %p118
      %p120 = scmp.ne.s32.totalorder %s106, %s107
      %p121 = scmp.eq.s32.totalorder %s23, 1
      %p122 = por %p120, %p121
      %p124 = scmp.ne.s32.totalorder %s107, %s123
      %p125 = scmp.eq.s32.totalorder %s23, 0
      %p126 = por %p124, %p125
      %p127 = scmp.le.s32.totalorder 1, %s17
      %p128 = scmp.lt.s32.totalorder %s17, 3
      %p129 = pnand %p127, %p128
      %p130 = pneg %p129
      // Predicated region
      $region9: #{tpu_custom_call.1} parent=5 // pred_check
        _
      $region10: #{tpu_custom_call.1} parent=5 // pred_check_branch
        %132 = sbr.rel (%p129) target = $region12
      $region11: #{tpu_custom_call.1} parent=5 // pred_region
        %s133 = ssub.s32 %s17, 1
      $region12: #{tpu_custom_call.1} parent=5 // pred_fallthru
        _
      %p134 = scmp.lt.s32.totalorder %s17, 2
      // Predicated region
      $region13: #{tpu_custom_call.1} parent=5 // pred_check
        %p135 = pneg %p134
      $region14: #{tpu_custom_call.1} parent=5 // pred_check_branch
        %137 = sbr.rel (%p135) target = $region16
      $region15: #{tpu_custom_call.1} parent=5 // pred_region
        // Predicated region
        $region17: #{tpu_custom_call.1} parent=15 // pred_check
          %p138 = pneg %p55
        $region18: #{tpu_custom_call.1} parent=15 // pred_check_branch
          %140 = sbr.rel (%p138) target = $region20
        $region19: #{tpu_custom_call.1} parent=15 // pred_region
          %s141 = sand.u32 %s45, 1
          %s142 = scalar_lea.sflag [#allocation3], %s141
          %s143 = sand.u32 %s45, 1
          %s144 = smul.addr %s143, 8
          %s145 = scalar_lea.vmem [#allocation2], %s144
          %s146 = sadd.s32 %s24, %s25
          %p147 = scmp.lt.s32.totalorder %s146, 1
          %s148 = scalar_select %p147, %s146, 1
          %150 = vsyncadd %s142, 0
          %s151 = smul.addr %s148, 8
          %s152 = scalar_lea.hbm %s0, %s151
          %s154 = sshll.u32 %s152, 4
          %s155 = int_to_ptr.hbm [resolvable:$true] %s154
          %s156 = sshll.u32 %s145, 4
          %s157 = int_to_ptr.vmem [resolvable:$true] %s156
          %159 = dma.hbm_to_vmem [thread:$0]  %s155, 128, %s157, %s142
        $region20: #{tpu_custom_call.1} parent=15 // pred_fallthru
          _
        // Predicated region
        $region21: #{tpu_custom_call.1} parent=15 // pred_check
          %p160 = pneg %p87
        $region22: #{tpu_custom_call.1} parent=15 // pred_check_branch
          %162 = sbr.rel (%p160) target = $region24
        $region23: #{tpu_custom_call.1} parent=15 // pred_region
          %s163 = sand.u32 %s77, 1
          %s164 = scalar_lea.sflag [#allocation6], %s163
          %s165 = sand.u32 %s77, 1
          %s166 = smul.addr %s165, 8
          %s167 = scalar_lea.vmem [#allocation5], %s166
          %s168 = sadd.s32 %s24, %s25
          %p169 = scmp.lt.s32.totalorder %s168, 1
          %s170 = scalar_select %p169, %s168, 1
          %172 = vsyncadd %s164, 0
          %s173 = smul.addr %s170, 8
          %s174 = scalar_lea.hbm %s1, %s173
          %s176 = sshll.u32 %s174, 4
          %s177 = int_to_ptr.hbm [resolvable:$true] %s176
          %s178 = sshll.u32 %s167, 4
          %s179 = int_to_ptr.vmem [resolvable:$true] %s178
          %181 = dma.hbm_to_vmem [thread:$0]  %s177, 128, %s179, %s164
        $region24: #{tpu_custom_call.1} parent=15 // pred_fallthru
          _
      $region16: #{tpu_custom_call.1} parent=5 // pred_fallthru
        _
      %p182 = scmp.le.s32.totalorder 1, %s17
      %p183 = scmp.lt.s32.totalorder %s17, 3
      %p184 = pnand %p182, %p183
      %p185 = pneg %p184
      // Predicated region
      $region25: #{tpu_custom_call.1} parent=5 // pred_check
        _
      $region26: #{tpu_custom_call.1} parent=5 // pred_check_branch
        %187 = sbr.rel (%p184) target = $region28
      $region27: #{tpu_custom_call.1} parent=5 // pred_region
        %s188 = ssub.s32 %s17, 1
        %s189 = sand.u32 %s48, 1
        %s190 = scalar_lea.sflag [#allocation3], %s189
        %s191 = sand.u32 %s48, 1
        %s192 = smul.addr %s191, 8
        %s193 = scalar_lea.vmem [#allocation2], %s192
        // Predicated region
        $region29: #{tpu_custom_call.1} parent=27 // pred_check
          %p194 = pneg %p61
        $region30: #{tpu_custom_call.1} parent=27 // pred_check_branch
          %196 = sbr.rel (%p194) target = $region32
        $region31: #{tpu_custom_call.1} parent=27 // pred_region
          %198 = dma.done %s190, 128
        $region32: #{tpu_custom_call.1} parent=27 // pred_fallthru
          _
        %s199 = sand.u32 %s80, 1
        %s200 = scalar_lea.sflag [#allocation6], %s199
        %s201 = sand.u32 %s80, 1
        %s202 = smul.addr %s201, 8
        %s203 = scalar_lea.vmem [#allocation5], %s202
        // Predicated region
        $region33: #{tpu_custom_call.1} parent=27 // pred_check
          %p204 = pneg %p93
        $region34: #{tpu_custom_call.1} parent=27 // pred_check_branch
          %206 = sbr.rel (%p204) target = $region36
        $region35: #{tpu_custom_call.1} parent=27 // pred_region
          %208 = dma.done %s200, 128
        $region36: #{tpu_custom_call.1} parent=27 // pred_fallthru
          _
        %s209 = sand.u32 %s48, 1
        %s210 = scalar_lea.sflag [#allocation3], %s209
        %s211 = sand.u32 %s48, 1
        %s212 = smul.addr %s211, 8
        %s213 = scalar_lea.vmem [#allocation2], %s212
        %p214 = pneg %p61
        %p215 = pneg %p58
        %s216 = sand.u32 %s80, 1
        %s217 = scalar_lea.sflag [#allocation6], %s216
        %s218 = sand.u32 %s80, 1
        %s219 = smul.addr %s218, 8
        %s220 = scalar_lea.vmem [#allocation5], %s219
        %p221 = pneg %p93
        %p222 = pneg %p90
        %p223 = pneg %p119
        %p224 = pneg %p116
        %s225 = sand.u32 %s106, 1
        %s226 = scalar_lea.sflag [#allocation4], %s225
        %s227 = sand.u32 %s106, 1
        %s228 = smul.addr %s227, 32
        %s229 = scalar_lea.vmem [#allocation7], %s228
        %s230 = sadd.s32 %s26, %s27
        %p231 = scmp.lt.s32.totalorder %s230, 1
        %s232 = scalar_select %p231, %s230, 1
        %s233 = sadd.s32 %s26, %s27
        %p234 = scmp.lt.s32.totalorder %s233, 1
        %s235 = scalar_select %p234, %s233, 1
        %s236 = sadd.s32 %s26, %s27
        %p237 = scmp.eq.s32.totalorder %s27, 0
        // Predicated region
        $region37: #{tpu_custom_call.1} parent=27 // pred_check
          %p238 = pneg %p237
        $region38: #{tpu_custom_call.1} parent=27 // pred_check_branch
          %240 = sbr.rel (%p238) target = $region40
        $region39: #{tpu_custom_call.1} parent=27 // pred_region
          %241 = vst [vmem:[%s229] sm:$0xff] 0.0
          %242 = vst [vmem:[%s229 + $0x8] sm:$0xff] 0.0
          %243 = vst [vmem:[%s229 + $0x10] sm:$0xff] 0.0
          %244 = vst [vmem:[%s229 + $0x18] sm:$0xff] 0.0
        $region40: #{tpu_custom_call.1} parent=27 // pred_fallthru
          _
        %s245 = sadd.s32 %s236, 1
        %s246 = smul.u32 %s245, 8
        %p247 = scmp.gt.s32.totalorder %s246, 16
        %p248 = scmp.le.s32.totalorder %s246, 16
        // Predicated region
        $region41: #{tpu_custom_call.1} parent=27 // pred_check
          %p249 = pneg %p248
        $region42: #{tpu_custom_call.1} parent=27 // pred_check_branch
          %251 = sbr.rel (%p249) target = $region44
        $region43: #{tpu_custom_call.1} parent=27 // pred_region
          %v252 = vld [vmem:[%s193] sm:$0xff]
          %v253 = vld [vmem:[%s203] sm:$0xff]
          %vm254 = vcmp.eq.f32.partialorder %v253, 1.0
          %vm255 = vcmp.eq.f32.partialorder %v253, 0.0
          %v256 = vmax.f32 %v252, 0.0
          %v257 = vmul.f32 %v252, %v253
          %v258 = vsub.f32 %v256, %v257
          %v259 = vand.u32 2147483647, %v252
          %v260 = vsub.f32 0.0, %v259
          %v261 = vmul.f32 %v260, 1.442695
          %v262 = vpow.pop %v261
          %v263 = vadd.f32 %v262, 1.0
          %v264 = vlog2.pop %v263
          %v265 = vmul.f32 %v264, 0.6931472
          %v266 = vmul.f32 -0.5, %v262
          %v267 = vadd.f32 %v266, 1.0
          %v268 = vmul.f32 %v267, %v262
          %v269 = vand.u32 2147483647, %v262
          %vm270 = vcmp.lt.f32.partialorder %v269, 0.0004427343
          %v271 = vsel %vm270, %v268, %v265
          %v272 = vadd.f32 %v258, %v271
          %v273 = vsel %vm254, 1.0, 0.0
          %v274 = vsel %vm255, 1.0, 0.0
          %v275 = vsel %vm254, %v272, 0.0
          %v276 = vsel %vm255, %v272, 0.0
          %v277 = vadd.f32 %v273, 0.0
          %v278 = vadd.f32 %v277, 0.0
          %v279 = vadd.f32 %v274, 0.0
          %v280 = vadd.f32 %v279, 0.0
          %v281 = vadd.f32 %v275, 0.0
          %v282 = vadd.f32 %v281, 0.0
          %v283 = vadd.f32 %v276, 0.0
          %v284 = vadd.f32 %v283, 0.0
          %v285 = vld [vmem:[%s229] sm:$0xff]
          %v286 = vadd.f32 %v285, %v278
          %287 = vst [vmem:[%s229] sm:$0xff] %v286
          %s288 = scalar_lea.vmem %s229, 8 [#allocation7]
          %v289 = vld [vmem:[%s288] sm:$0xff]
          %v290 = vadd.f32 %v289, %v280
          %291 = vst [vmem:[%s288] sm:$0xff] %v290
          %s292 = scalar_lea.vmem %s229, 16 [#allocation7]
          %v293 = vld [vmem:[%s292] sm:$0xff]
          %v294 = vadd.f32 %v293, %v282
          %295 = vst [vmem:[%s292] sm:$0xff] %v294
          %s296 = scalar_lea.vmem %s229, 24 [#allocation7]
          %v297 = vld [vmem:[%s296] sm:$0xff]
          %v298 = vadd.f32 %v297, %v284
          %299 = vst [vmem:[%s296] sm:$0xff] %v298
        $region44: #{tpu_custom_call.1} parent=27 // pred_fallthru
          _
        // Predicated region
        $region45: #{tpu_custom_call.1} parent=27 // pred_check
          %p300 = pneg %p247
        $region46: #{tpu_custom_call.1} parent=27 // pred_check_branch
          %302 = sbr.rel (%p300) target = $region48
        $region47: #{tpu_custom_call.1} parent=27 // pred_region
          %s303 = smul.u32 %s236, 8
          %s304 = sadd.s32 %s303, 0
          %v305 = vlaneseq
          %v306 = vshrl.u32 %v305, 7
          %v307 = vstv %s304
          %v308 = vadd.s32 %v307, %v306
          %vm309 = vcmp.lt.s32.totalorder %v308, 16
          %v310 = vld [vmem:[%s193] sm:$0xff]
          %v311 = vld [vmem:[%s203] sm:$0xff]
          %vm312 = vcmp.eq.f32.partialorder %v311, 1.0
          %vm313 = vcmp.eq.f32.partialorder %v311, 0.0
          %vm314 = vmand %vm312, %vm309
          %vm315 = vmand %vm313, %vm309
          %v316 = vmax.f32 %v310, 0.0
          %v317 = vmul.f32 %v310, %v311
          %v318 = vsub.f32 %v316, %v317
          %v319 = vand.u32 2147483647, %v310
          %v320 = vsub.f32 0.0, %v319
          %v321 = vmul.f32 %v320, 1.442695
          %v322 = vpow.pop %v321
          %v323 = vadd.f32 %v322, 1.0
          %v324 = vlog2.pop %v323
          %v325 = vmul.f32 %v324, 0.6931472
          %v326 = vmul.f32 -0.5, %v322
          %v327 = vadd.f32 %v326, 1.0
          %v328 = vmul.f32 %v327, %v322
          %v329 = vand.u32 2147483647, %v322
          %vm330 = vcmp.lt.f32.partialorder %v329, 0.0004427343
          %v331 = vsel %vm330, %v328, %v325
          %v332 = vadd.f32 %v318, %v331
          %v333 = vsel %vm314, 1.0, 0.0
          %v334 = vsel %vm315, 1.0, 0.0
          %v335 = vsel %vm314, %v332, 0.0
          %v336 = vsel %vm315, %v332, 0.0
          %v337 = vadd.f32 %v333, 0.0
          %v338 = vadd.f32 %v337, 0.0
          %v339 = vadd.f32 %v334, 0.0
          %v340 = vadd.f32 %v339, 0.0
          %v341 = vadd.f32 %v335, 0.0
          %v342 = vadd.f32 %v341, 0.0
          %v343 = vadd.f32 %v336, 0.0
          %v344 = vadd.f32 %v343, 0.0
          %v345 = vld [vmem:[%s229] sm:$0xff]
          %v346 = vadd.f32 %v345, %v338
          %347 = vst [vmem:[%s229] sm:$0xff] %v346
          %s348 = scalar_lea.vmem %s229, 8 [#allocation7]
          %v349 = vld [vmem:[%s348] sm:$0xff]
          %v350 = vadd.f32 %v349, %v340
          %351 = vst [vmem:[%s348] sm:$0xff] %v350
          %s352 = scalar_lea.vmem %s229, 16 [#allocation7]
          %v353 = vld [vmem:[%s352] sm:$0xff]
          %v354 = vadd.f32 %v353, %v342
          %355 = vst [vmem:[%s352] sm:$0xff] %v354
          %s356 = scalar_lea.vmem %s229, 24 [#allocation7]
          %v357 = vld [vmem:[%s356] sm:$0xff]
          %v358 = vadd.f32 %v357, %v344
          %359 = vst [vmem:[%s356] sm:$0xff] %v358
        $region48: #{tpu_custom_call.1} parent=27 // pred_fallthru
          _
        %s360 = sand.u32 %s106, 1
        %s361 = scalar_lea.sflag [#allocation4], %s360
        %s362 = sand.u32 %s106, 1
        %s363 = smul.addr %s362, 32
        %s364 = scalar_lea.vmem [#allocation7], %s363
        // Predicated region
        $region49: #{tpu_custom_call.1} parent=27 // pred_check
          %p365 = pneg %p116
        $region50: #{tpu_custom_call.1} parent=27 // pred_check_branch
          %367 = sbr.rel (%p365) target = $region52
        $region51: #{tpu_custom_call.1} parent=27 // pred_region
          %369 = vsyncadd %s361, 0
          %s370 = smul.addr %s26, 4
          %s371 = smul.addr %s370, 8
          %s372 = scalar_lea.hbm %s2, %s371
          %s373 = sshll.u32 %s364, 4
          %s374 = int_to_ptr.vmem [resolvable:$true] %s373
          %s375 = sshll.u32 %s372, 4
          %s376 = int_to_ptr.hbm [resolvable:$true] %s375
          %381 = dma.vmem_to_hbm [thread:$0]  %s374, 512, %s376, %s361, 128, 128, 8
        $region52: #{tpu_custom_call.1} parent=27 // pred_fallthru
          _
      $region28: #{tpu_custom_call.1} parent=5 // pred_fallthru
        _
      %p382 = scmp.le.s32.totalorder 2, %s17
      // Predicated region
      $region53: #{tpu_custom_call.1} parent=5 // pred_check
        %p383 = pneg %p382
      $region54: #{tpu_custom_call.1} parent=5 // pred_check_branch
        %385 = sbr.rel (%p383) target = $region56
      $region55: #{tpu_custom_call.1} parent=5 // pred_region
        %s386 = ssub.s32 %s17, 2
        // Predicated region
        $region57: #{tpu_custom_call.1} parent=55 // pred_check
          %p387 = pneg %p122
        $region58: #{tpu_custom_call.1} parent=55 // pred_check_branch
          %389 = sbr.rel (%p387) target = $region60
        $region59: #{tpu_custom_call.1} parent=55 // pred_region
          %s390 = sand.u32 %s107, 1
          %s391 = scalar_lea.sflag [#allocation4], %s390
          %s392 = sand.u32 %s107, 1
          %s393 = smul.addr %s392, 32
          %s394 = scalar_lea.vmem [#allocation7], %s393
          %396 = dma.done %s391, 512
        $region60: #{tpu_custom_call.1} parent=55 // pred_fallthru
          _
      $region56: #{tpu_custom_call.1} parent=5 // pred_fallthru
        _
    $region6: #{tpu_custom_call.1} parent=1 // loop_footer
      %s21 = sadd.s32 1, %s17
    $region7: #{tpu_custom_call.1} parent=1 // loop_footer_branch
      %16 = sbr.rel target = $region3
    $region8: #{tpu_custom_call.1} parent=1 // loop_exit
      _
    %397 = vsyncpa [#allocation3], 1
    %s398 = scalar_lea.sflag [#allocation3], 1
    %399 = vsyncpa %s398, 1
    %400 = vsyncpa [#allocation6], 1
    %s401 = scalar_lea.sflag [#allocation6], 1
    %402 = vsyncpa %s401, 1
    %403 = vsyncpa [#allocation4], 1
    %s404 = scalar_lea.sflag [#allocation4], 1
    %405 = vsyncpa %s404, 1

</llo_original>
